<compile_context>
chip_gen: v7x
topology: tpu7x:2x2x1
jax: 0.10.0
libtpu: 0.0.40
codegen_flags: <defaults>
</compile_context>

<pallas_src>
import functools

import jax
import jax.numpy as jnp
from jax.experimental import pallas as pl
from jax.experimental.pallas import tpu as pltpu


def _make_fused_gcn_kernel(hw_first_flags, compute_dtype):
    """Build a kernel computing all GCN layers in one body.

    hw_first_flags[i] == True  ->  H = relu(A @ (H @ W_i))   (narrowing layer)
    hw_first_flags[i] == False ->  H = relu((A @ H) @ W_i)
    """
    n_layers = len(hw_first_flags)

    def kernel(*refs):
        a_ref, x_ref = refs[0], refs[1]
        w_refs = refs[2:2 + n_layers]
        o_ref = refs[2 + n_layers]

        a = a_ref[...].astype(compute_dtype)          # [N, N]
        h = x_ref[...]                                # [N, F0], f32
        for w_ref, hw_first in zip(w_refs, hw_first_flags):
            w = w_ref[...].astype(compute_dtype)      # [F_in, F_out]
            h_in = h.astype(compute_dtype)
            if hw_first:
                # Narrowing layer: A @ (H @ W) has fewer MACs when F_out < F_in.
                hw = jnp.dot(h_in, w, preferred_element_type=jnp.float32)
                h = jnp.dot(a, hw.astype(compute_dtype),
                            preferred_element_type=jnp.float32)
            else:
                ah = jnp.dot(a, h_in, preferred_element_type=jnp.float32)
                h = jnp.dot(ah.astype(compute_dtype), w,
                            preferred_element_type=jnp.float32)
            h = jnp.maximum(h, 0.0)                   # relu in f32
        o_ref[...] = h.astype(o_ref.dtype)

    return kernel


@functools.partial(jax.jit, static_argnames=("use_bf16",))
def gcn_forward(A, X, Ws, use_bf16=False):
    """Mirrors GCN.forward: H = X; for each layer H = relu(A @ H @ W[i])."""
    N = A.shape[0]
    dims = [X.shape[1]] + [w.shape[1] for w in Ws]        # [f_in, ..., f_out]
    # Re-associate to A @ (H @ W) only when the layer narrows the feature dim.
    hw_first = tuple(dims[i + 1] < dims[i] for i in range(len(Ws)))
    compute_dtype = jnp.bfloat16 if use_bf16 else jnp.float32

    return pl.pallas_call(
        _make_fused_gcn_kernel(hw_first, compute_dtype),
        out_shape=jax.ShapeDtypeStruct((N, dims[-1]), jnp.float32),
        in_specs=[pl.BlockSpec(memory_space=pltpu.MemorySpace.VMEM)
                  for _ in range(2 + len(Ws))],
        out_specs=pl.BlockSpec(memory_space=pltpu.MemorySpace.VMEM),
    )(A, X, *Ws)


def make_gcn_params(key, input_dim=48, hidden_dim=72, out_dim=8, gcn_layers=2):
    """Deterministic stand-in for torch.randn parameter init."""
    Ws = []
    for i in range(gcn_layers):
        key, sub = jax.random.split(key)
        if i == 0:
            shape = (input_dim, hidden_dim)
        elif i == gcn_layers - 1:
            shape = (hidden_dim, out_dim)
        else:
            shape = (hidden_dim, hidden_dim)
        Ws.append(jax.random.normal(sub, shape, dtype=jnp.float32))
    return Ws


if __name__ == "__main__":
    key = jax.random.PRNGKey(0)
    k_a, k_x, k_w = jax.random.split(key, 3)

    N = 16            # number of graph nodes
    input_dim = 48
    hidden_dim = 72
    out_dim = 8
    gcn_layers = 2

    # Raw randn A matches the PyTorch stand-in (no adjacency normalization).
    A = jax.random.normal(k_a, (N, N), dtype=jnp.float32)
    X = jax.random.normal(k_x, (N, input_dim), dtype=jnp.float32)
    Ws = make_gcn_params(k_w, input_dim, hidden_dim, out_dim, gcn_layers)

    feat = gcn_forward(A, X, Ws)
    jax.block_until_ready(feat)

    # Pure-JAX reference ((A @ H) @ W ordering, as in the PyTorch module).
    H_ref = X
    for W in Ws:
        H_ref = jnp.maximum(A @ H_ref @ W, 0.0)

    assert feat.shape == (N, out_dim), feat.shape
    # f32 accumulation everywhere; only re-association of the narrowing layer
    # differs from the reference, so relative error stays ~1e-6.
    rel_err = jnp.max(jnp.abs(feat - H_ref)) / (jnp.max(jnp.abs(H_ref)) + 1e-6)
    assert rel_err < 1e-4, f"mismatch vs reference: rel_err={rel_err}"

    print("KERNEL_OK")
</pallas_src>

<mosaic_0001>
module attributes {stable_mosaic.version = 11 : i64} {
  func.func @kernel(%arg0: memref<16x16xf32, #tpu.memory_space<vmem>>, %arg1: memref<16x48xf32, #tpu.memory_space<vmem>>, %arg2: memref<48x72xf32, #tpu.memory_space<vmem>>, %arg3: memref<72x8xf32, #tpu.memory_space<vmem>>, %arg4: memref<16x8xf32, #tpu.memory_space<vmem>>) attributes {dimension_semantics = [], scalar_prefetch = 0 : i64, scratch_operands = 0 : i64, tpu.core_type = #tpu.core_type<tc>} {
    %c0 = arith.constant 0 : index
    %c0_0 = arith.constant 0 : index
    %0 = vector.load %arg0[%c0, %c0_0] : memref<16x16xf32, #tpu.memory_space<vmem>>, vector<16x16xf32>
    %c0_1 = arith.constant 0 : index
    %c0_2 = arith.constant 0 : index
    %1 = vector.load %arg1[%c0_1, %c0_2] : memref<16x48xf32, #tpu.memory_space<vmem>>, vector<16x48xf32>
    %c0_3 = arith.constant 0 : index
    %c0_4 = arith.constant 0 : index
    %2 = vector.load %arg2[%c0_3, %c0_4] : memref<48x72xf32, #tpu.memory_space<vmem>>, vector<48x72xf32>
    %cst = arith.constant dense<0.000000e+00> : vector<16x48xf32>
    %3 = tpu.matmul %0, %1, %cst {dimension_numbers = #tpu.dot_dimension_numbers<[1], [0], [0], [1], [0, 0, 1, 1], [], []>} : vector<16x16xf32>, vector<16x48xf32>, vector<16x48xf32> -> vector<16x48xf32>
    %cst_5 = arith.constant dense<0.000000e+00> : vector<16x72xf32>
    %4 = tpu.matmul %3, %2, %cst_5 {dimension_numbers = #tpu.dot_dimension_numbers<[1], [0], [0], [1], [0, 0, 1, 1], [], []>} : vector<16x48xf32>, vector<48x72xf32>, vector<16x72xf32> -> vector<16x72xf32>
    %cst_6 = arith.constant 0.000000e+00 : f32
    %5 = vector.broadcast %cst_6 : f32 to vector<16x72xf32>
    %6 = arith.maximumf %4, %5 : vector<16x72xf32>
    %c0_7 = arith.constant 0 : index
    %c0_8 = arith.constant 0 : index
    %7 = vector.load %arg3[%c0_7, %c0_8] : memref<72x8xf32, #tpu.memory_space<vmem>>, vector<72x8xf32>
    %cst_9 = arith.constant dense<0.000000e+00> : vector<16x8xf32>
    %8 = tpu.matmul %6, %7, %cst_9 {dimension_numbers = #tpu.dot_dimension_numbers<[1], [0], [0], [1], [0, 0, 1, 1], [], []>} : vector<16x72xf32>, vector<72x8xf32>, vector<16x8xf32> -> vector<16x8xf32>
    %cst_10 = arith.constant dense<0.000000e+00> : vector<16x8xf32>
    %9 = tpu.matmul %0, %8, %cst_10 {dimension_numbers = #tpu.dot_dimension_numbers<[1], [0], [0], [1], [0, 0, 1, 1], [], []>} : vector<16x16xf32>, vector<16x8xf32>, vector<16x8xf32> -> vector<16x8xf32>
    %cst_11 = arith.constant 0.000000e+00 : f32
    %10 = vector.broadcast %cst_11 : f32 to vector<16x8xf32>
    %11 = arith.maximumf %9, %10 : vector<16x8xf32>
    %c0_12 = arith.constant 0 : index
    %c0_13 = arith.constant 0 : index
    %12 = vector.load %arg4[%c0_12, %c0_13] : memref<16x8xf32, #tpu.memory_space<vmem>>, vector<16x8xf32>
    tpu.vector_store %arg4[%c0_12, %c0_13], %11 {strides = array<i32>} : memref<16x8xf32, #tpu.memory_space<vmem>>, vector<16x8xf32>,
    return
  }
}

</mosaic_0001>

<llo_original>
// kernel: gcn_forward.1
$region0: #{gcn_forward.1}
  #allocation0 [shape = 'u32[]', space=smem, size = 0x4, offset = 0x4, fixed_abs, tag = 'smem constant byte address 0x4 - core index']
  #allocation1 [shape = 'u32[144,128]{1,0:T(1,128)}', space=vmem, size = 0x12000, scoped, tag = 'internal scratch']
  %s0 = inlined_call_operand.vmem [shape: f32[16,16], index: 0, kind: input, shape index: {}]
  %s1 = inlined_call_operand.vmem [shape: f32[16,48], index: 1, kind: input, shape index: {}]
  %s2 = inlined_call_operand.vmem [shape: f32[48,72], index: 2, kind: input, shape index: {}]
  %s3 = inlined_call_operand.vmem [shape: f32[72,8], index: 3, kind: input, shape index: {}]
  %s4 = inlined_call_operand.vmem [shape: f32[16,8], index: 4, kind: output, shape index: {}]
  %s5 = sld [smem:[#allocation0]]
  $region26: #{gcn_forward.1} parent=0
    _
  %s7 = ssub.s32 1, %s5
  %s8 = scalar_select 0, %s7, %s5
  // Predicated region
  $region2: #{gcn_forward.1} parent=0 // pred_check
    _
  $region3: #{gcn_forward.1} parent=0 // pred_check_branch
    %10 = sbr.rel (0) target = $region5
  $region4: #{gcn_forward.1} parent=0 // pred_region
    _
  $region5: #{gcn_forward.1} parent=0 // pred_fallthru
    _
  // Predicated region
  $region6: #{gcn_forward.1} parent=0 // pred_check
    _
  $region7: #{gcn_forward.1} parent=0 // pred_check_branch
    %12 = sbr.rel (0) target = $region9
  $region8: #{gcn_forward.1} parent=0 // pred_region
    _
  $region9: #{gcn_forward.1} parent=0 // pred_fallthru
    _
  // Predicated region
  $region10: #{gcn_forward.1} parent=0 // pred_check
    _
  $region11: #{gcn_forward.1} parent=0 // pred_check_branch
    %14 = sbr.rel (0) target = $region13
  $region12: #{gcn_forward.1} parent=0 // pred_region
    _
  $region13: #{gcn_forward.1} parent=0 // pred_fallthru
    _
  // Predicated region
  $region14: #{gcn_forward.1} parent=0 // pred_check
    _
  $region15: #{gcn_forward.1} parent=0 // pred_check_branch
    %16 = sbr.rel (0) target = $region17
  $region16: #{gcn_forward.1} parent=0 // pred_region
    _
  $region17: #{gcn_forward.1} parent=0 // pred_fallthru
    _
  %v17 = vld [vmem:[%s0] sm:$0xff]
  %v18 = vld [vmem:[%s0 + $0x8] sm:$0xff]
  %v19 = vld [vmem:[%s1] sm:$0xff]
  %v20 = vld [vmem:[%s1 + $0x8] sm:$0xff]
  %v21 = vld [vmem:[%s2] sm:$0xff]
  %v22 = vld [vmem:[%s2 + $0x8] sm:$0xff]
  %v23 = vld [vmem:[%s2 + $0x10] sm:$0xff]
  %v24 = vld [vmem:[%s2 + $0x18] sm:$0xff]
  %v25 = vld [vmem:[%s2 + $0x20] sm:$0xff]
  %v26 = vld [vmem:[%s2 + $0x28] sm:$0xff]
  %vm27 = vcmask 130048
  %v29 = vsel %vm27, %v17, 0
  %v32 = vsel %vm27, %v18, 0
  %34 = vmatprep.subr.mxu0 0.0
  %35 = vmatpush1.msra.mxu0 %v19
  %36 = vmatprep.subr.mxu0 0.0
  %37 = vmatpush1.msra.mxu0 %v20
  %38 = vmatprep.subr.mxu0 0.0
  %39 = vmatpush1.msra.mxu0 0.0
  %40 = vmatprep.subr.mxu0 0.0
  %41 = vmatpush1.msra.mxu0 0.0
  %42 = vmatprep.subr.mxu0 0.0
  %43 = vmatpush1.msra.mxu0 0.0
  %44 = vmatprep.subr.mxu0 0.0
  %45 = vmatpush1.msra.mxu0 0.0
  %46 = vmatprep.subr.mxu0 0.0
  %47 = vmatpush1.msra.mxu0 0.0
  %48 = vmatprep.subr.mxu0 0.0
  %49 = vmatpush1.msra.mxu0 0.0
  %50 = vmatprep.subr.mxu0 0.0
  %51 = vmatpush1.msra.mxu0 0.0
  %52 = vmatprep.subr.mxu0 0.0
  %53 = vmatpush1.msra.mxu0 0.0
  %54 = vmatprep.subr.mxu0 0.0
  %55 = vmatpush1.msra.mxu0 0.0
  %56 = vmatprep.subr.mxu0 0.0
  %57 = vmatpush1.msra.mxu0 0.0
  %58 = vmatprep.subr.mxu0 0.0
  %59 = vmatpush1.msra.mxu0 0.0
  %60 = vmatprep.subr.mxu0 0.0
  %61 = vmatpush1.msra.mxu0 0.0
  %62 = vmatprep.subr.mxu0 0.0
  %63 = vmatpush1.msra.mxu0 0.0
  %64 = vmatprep.subr.mxu0 0.0
  %65 = vmatpush1.msra.mxu0 0.0
  %66 = vmatprep.subr.mxu0 0.0
  %67 = vmatpush1.msra.mxu0 0.0
  %68 = vmatprep.subr.mxu0 0.0
  %69 = vmatpush1.msra.mxu0 0.0
  %70 = vmatprep.subr.mxu0 0.0
  %71 = vmatpush1.msra.mxu0 0.0
  %72 = vmatprep.subr.mxu0 0.0
  %73 = vmatpush1.msra.mxu0 0.0
  %74 = vmatprep.subr.mxu0 0.0
  %75 = vmatpush1.msra.mxu0 0.0
  %76 = vmatprep.subr.mxu0 0.0
  %77 = vmatpush1.msra.mxu0 0.0
  %78 = vmatprep.subr.mxu0 0.0
  %79 = vmatpush1.msra.mxu0 0.0
  %80 = vmatprep.subr.mxu0 0.0
  %81 = vmatpush1.msra.mxu0 0.0
  %82 = vmatprep.subr.mxu0 0.0
  %83 = vmatpush1.msra.mxu0 0.0
  %84 = vmatprep.subr.mxu0 0.0
  %85 = vmatpush1.msra.mxu0 0.0
  %86 = vmatprep.subr.mxu0 0.0
  %87 = vmatpush1.msra.mxu0 0.0
  %88 = vmatprep.subr.mxu0 0.0
  %89 = vmatpush1.msra.mxu0 0.0
  %90 = vmatprep.subr.mxu0 0.0
  %91 = vmatpush1.msra.mxu0 0.0
  %92 = vmatprep.subr.mxu0 0.0
  %93 = vmatpush1.msra.mxu0 0.0
  %94 = vmatprep.subr.mxu0 0.0
  %95 = vmatpush1.msra.mxu0 0.0
  %96 = vmatprep.subr.mxu0 0.0
  %97 = vmatpush1.msra.mxu0 0.0
  %98 = vmatprep.mubr.f32.mxu0 0.0
  %99 = vmatmul.mubr.f32.gmra.mrb[0].mxu0 %v29
  %v100 = vpop.f32.mrb[0].mxu0
  %v101 = vadd.f32 0.0, %v100
  %v102 = vpop.f32.mrb[0].mxu0
  %103 = vmatprep.mubr.f32.mxu0 0.0
  %104 = vmatmul.mubr.f32.gmra.mrb[0].mxu0 %v32
  %v105 = vpop.f32.mrb[0].mxu0
  %v106 = vadd.f32 0.0, %v105
  %v107 = vpop.f32.mrb[0].mxu0
  %108 = vdwg.mxu0
  %vm109 = vcmask 392192
  %v111 = vsel %vm109, %v101, 0
  %v114 = vsel %vm109, %v106, 0
  %116 = vmatprep.subr.mxu0 0.0
  %117 = vmatpush1.msra.mxu0 %v21
  %118 = vmatprep.subr.mxu0 0.0
  %119 = vmatpush1.msra.mxu0 %v22
  %120 = vmatprep.subr.mxu0 0.0
  %121 = vmatpush1.msra.mxu0 %v23
  %122 = vmatprep.subr.mxu0 0.0
  %123 = vmatpush1.msra.mxu0 %v24
  %124 = vmatprep.subr.mxu0 0.0
  %125 = vmatpush1.msra.mxu0 %v25
  %126 = vmatprep.subr.mxu0 0.0
  %127 = vmatpush1.msra.mxu0 %v26
  %128 = vmatprep.subr.mxu0 0.0
  %129 = vmatpush1.msra.mxu0 0.0
  %130 = vmatprep.subr.mxu0 0.0
  %131 = vmatpush1.msra.mxu0 0.0
  %132 = vmatprep.subr.mxu0 0.0
  %133 = vmatpush1.msra.mxu0 0.0
  %134 = vmatprep.subr.mxu0 0.0
  %135 = vmatpush1.msra.mxu0 0.0
  %136 = vmatprep.subr.mxu0 0.0
  %137 = vmatpush1.msra.mxu0 0.0
  %138 = vmatprep.subr.mxu0 0.0
  %139 = vmatpush1.msra.mxu0 0.0
  %140 = vmatprep.subr.mxu0 0.0
  %141 = vmatpush1.msra.mxu0 0.0
  %142 = vmatprep.subr.mxu0 0.0
  %143 = vmatpush1.msra.mxu0 0.0
  %144 = vmatprep.subr.mxu0 0.0
  %145 = vmatpush1.msra.mxu0 0.0
  %146 = vmatprep.subr.mxu0 0.0
  %147 = vmatpush1.msra.mxu0 0.0
  %148 = vmatprep.subr.mxu0 0.0
  %149 = vmatpush1.msra.mxu0 0.0
  %150 = vmatprep.subr.mxu0 0.0
  %151 = vmatpush1.msra.mxu0 0.0
  %152 = vmatprep.subr.mxu0 0.0
  %153 = vmatpush1.msra.mxu0 0.0
  %154 = vmatprep.subr.mxu0 0.0
  %155 = vmatpush1.msra.mxu0 0.0
  %156 = vmatprep.subr.mxu0 0.0
  %157 = vmatpush1.msra.mxu0 0.0
  %158 = vmatprep.subr.mxu0 0.0
  %159 = vmatpush1.msra.mxu0 0.0
  %160 = vmatprep.subr.mxu0 0.0
  %161 = vmatpush1.msra.mxu0 0.0
  %162 = vmatprep.subr.mxu0 0.0
  %163 = vmatpush1.msra.mxu0 0.0
  %164 = vmatprep.subr.mxu0 0.0
  %165 = vmatpush1.msra.mxu0 0.0
  %166 = vmatprep.subr.mxu0 0.0
  %167 = vmatpush1.msra.mxu0 0.0
  %168 = vmatprep.subr.mxu0 0.0
  %169 = vmatpush1.msra.mxu0 0.0
  %170 = vmatprep.subr.mxu0 0.0
  %171 = vmatpush1.msra.mxu0 0.0
  %172 = vmatprep.subr.mxu0 0.0
  %173 = vmatpush1.msra.mxu0 0.0
  %174 = vmatprep.subr.mxu0 0.0
  %175 = vmatpush1.msra.mxu0 0.0
  %176 = vmatprep.subr.mxu0 0.0
  %177 = vmatpush1.msra.mxu0 0.0
  %178 = vmatprep.subr.mxu0 0.0
  %179 = vmatpush1.msra.mxu0 0.0
  %180 = vmatprep.mubr.f32.mxu0 0.0
  %181 = vmatmul.mubr.f32.gmra.mrb[0].mxu0 %v111
  %v182 = vpop.f32.mrb[0].mxu0
  %v183 = vadd.f32 0.0, %v182
  %v184 = vpop.f32.mrb[0].mxu0
  %185 = vmatprep.mubr.f32.mxu0 0.0
  %186 = vmatmul.mubr.f32.gmra.mrb[0].mxu0 %v114
  %v187 = vpop.f32.mrb[0].mxu0
  %v188 = vadd.f32 0.0, %v187
  %v189 = vpop.f32.mrb[0].mxu0
  %190 = vdwg.mxu0
  %v191 = vmax.f32 %v183, 0.0
  %v192 = vmax.f32 %v188, 0.0
  %v193 = vld [vmem:[%s3] sm:$0xff]
  %v194 = vld [vmem:[%s3 + $0x8] sm:$0xff]
  %v195 = vld [vmem:[%s3 + $0x10] sm:$0xff]
  %v196 = vld [vmem:[%s3 + $0x18] sm:$0xff]
  %v197 = vld [vmem:[%s3 + $0x20] sm:$0xff]
  %v198 = vld [vmem:[%s3 + $0x28] sm:$0xff]
  %v199 = vld [vmem:[%s3 + $0x30] sm:$0xff]
  %v200 = vld [vmem:[%s3 + $0x38] sm:$0xff]
  %v201 = vld [vmem:[%s3 + $0x40] sm:$0xff]
  %vm202 = vcmask 588800
  %v204 = vsel %vm202, %v191, 0
  %v207 = vsel %vm202, %v192, 0
  %209 = vmatprep.subr.mxu0 0.0
  %210 = vmatpush1.msra.mxu0 %v193
  %211 = vmatprep.subr.mxu0 0.0
  %212 = vmatpush1.msra.mxu0 %v194
  %213 = vmatprep.subr.mxu0 0.0
  %214 = vmatpush1.msra.mxu0 %v195
  %215 = vmatprep.subr.mxu0 0.0
  %216 = vmatpush1.msra.mxu0 %v196
  %217 = vmatprep.subr.mxu0 0.0
  %218 = vmatpush1.msra.mxu0 %v197
  %219 = vmatprep.subr.mxu0 0.0
  %220 = vmatpush1.msra.mxu0 %v198
  %221 = vmatprep.subr.mxu0 0.0
  %222 = vmatpush1.msra.mxu0 %v199
  %223 = vmatprep.subr.mxu0 0.0
  %224 = vmatpush1.msra.mxu0 %v200
  %225 = vmatprep.subr.mxu0 0.0
  %226 = vmatpush1.msra.mxu0 %v201
  %227 = vmatprep.subr.mxu0 0.0
  %228 = vmatpush1.msra.mxu0 0.0
  %229 = vmatprep.subr.mxu0 0.0
  %230 = vmatpush1.msra.mxu0 0.0
  %231 = vmatprep.subr.mxu0 0.0
  %232 = vmatpush1.msra.mxu0 0.0
  %233 = vmatprep.subr.mxu0 0.0
  %234 = vmatpush1.msra.mxu0 0.0
  %235 = vmatprep.subr.mxu0 0.0
  %236 = vmatpush1.msra.mxu0 0.0
  %237 = vmatprep.subr.mxu0 0.0
  %238 = vmatpush1.msra.mxu0 0.0
  %239 = vmatprep.subr.mxu0 0.0
  %240 = vmatpush1.msra.mxu0 0.0
  %241 = vmatprep.subr.mxu0 0.0
  %242 = vmatpush1.msra.mxu0 0.0
  %243 = vmatprep.subr.mxu0 0.0
  %244 = vmatpush1.msra.mxu0 0.0
  %245 = vmatprep.subr.mxu0 0.0
  %246 = vmatpush1.msra.mxu0 0.0
  %247 = vmatprep.subr.mxu0 0.0
  %248 = vmatpush1.msra.mxu0 0.0
  %249 = vmatprep.subr.mxu0 0.0
  %250 = vmatpush1.msra.mxu0 0.0
  %251 = vmatprep.subr.mxu0 0.0
  %252 = vmatpush1.msra.mxu0 0.0
  %253 = vmatprep.subr.mxu0 0.0
  %254 = vmatpush1.msra.mxu0 0.0
  %255 = vmatprep.subr.mxu0 0.0
  %256 = vmatpush1.msra.mxu0 0.0
  %257 = vmatprep.subr.mxu0 0.0
  %258 = vmatpush1.msra.mxu0 0.0
  %259 = vmatprep.subr.mxu0 0.0
  %260 = vmatpush1.msra.mxu0 0.0
  %261 = vmatprep.subr.mxu0 0.0
  %262 = vmatpush1.msra.mxu0 0.0
  %263 = vmatprep.subr.mxu0 0.0
  %264 = vmatpush1.msra.mxu0 0.0
  %265 = vmatprep.subr.mxu0 0.0
  %266 = vmatpush1.msra.mxu0 0.0
  %267 = vmatprep.subr.mxu0 0.0
  %268 = vmatpush1.msra.mxu0 0.0
  %269 = vmatprep.subr.mxu0 0.0
  %270 = vmatpush1.msra.mxu0 0.0
  %271 = vmatprep.subr.mxu0 0.0
  %272 = vmatpush1.msra.mxu0 0.0
  %273 = vmatprep.mubr.f32.mxu0 0.0
  %274 = vmatmul.mubr.f32.gmra.mrb[0].mxu0 %v204
  %v275 = vpop.f32.mrb[0].mxu0
  %v276 = vadd.f32 0.0, %v275
  %v277 = vpop.f32.mrb[0].mxu0
  %278 = vmatprep.mubr.f32.mxu0 0.0
  %279 = vmatmul.mubr.f32.gmra.mrb[0].mxu0 %v207
  %v280 = vpop.f32.mrb[0].mxu0
  %v281 = vadd.f32 0.0, %v280
  %v282 = vpop.f32.mrb[0].mxu0
  %283 = vdwg.mxu0
  %284 = vmatprep.subr.mxu0 0.0
  %285 = vmatpush1.msra.mxu0 %v276
  %286 = vmatprep.subr.mxu0 0.0
  %287 = vmatpush1.msra.mxu0 %v281
  %288 = vmatprep.subr.mxu0 0.0
  %289 = vmatpush1.msra.mxu0 0.0
  %290 = vmatprep.subr.mxu0 0.0
  %291 = vmatpush1.msra.mxu0 0.0
  %292 = vmatprep.subr.mxu0 0.0
  %293 = vmatpush1.msra.mxu0 0.0
  %294 = vmatprep.subr.mxu0 0.0
  %295 = vmatpush1.msra.mxu0 0.0
  %296 = vmatprep.subr.mxu0 0.0
  %297 = vmatpush1.msra.mxu0 0.0
  %298 = vmatprep.subr.mxu0 0.0
  %299 = vmatpush1.msra.mxu0 0.0
  %300 = vmatprep.subr.mxu0 0.0
  %301 = vmatpush1.msra.mxu0 0.0
  %302 = vmatprep.subr.mxu0 0.0
  %303 = vmatpush1.msra.mxu0 0.0
  %304 = vmatprep.subr.mxu0 0.0
  %305 = vmatpush1.msra.mxu0 0.0
  %306 = vmatprep.subr.mxu0 0.0
  %307 = vmatpush1.msra.mxu0 0.0
  %308 = vmatprep.subr.mxu0 0.0
  %309 = vmatpush1.msra.mxu0 0.0
  %310 = vmatprep.subr.mxu0 0.0
  %311 = vmatpush1.msra.mxu0 0.0
  %312 = vmatprep.subr.mxu0 0.0
  %313 = vmatpush1.msra.mxu0 0.0
  %314 = vmatprep.subr.mxu0 0.0
  %315 = vmatpush1.msra.mxu0 0.0
  %316 = vmatprep.subr.mxu0 0.0
  %317 = vmatpush1.msra.mxu0 0.0
  %318 = vmatprep.subr.mxu0 0.0
  %319 = vmatpush1.msra.mxu0 0.0
  %320 = vmatprep.subr.mxu0 0.0
  %321 = vmatpush1.msra.mxu0 0.0
  %322 = vmatprep.subr.mxu0 0.0
  %323 = vmatpush1.msra.mxu0 0.0
  %324 = vmatprep.subr.mxu0 0.0
  %325 = vmatpush1.msra.mxu0 0.0
  %326 = vmatprep.subr.mxu0 0.0
  %327 = vmatpush1.msra.mxu0 0.0
  %328 = vmatprep.subr.mxu0 0.0
  %329 = vmatpush1.msra.mxu0 0.0
  %330 = vmatprep.subr.mxu0 0.0
  %331 = vmatpush1.msra.mxu0 0.0
  %332 = vmatprep.subr.mxu0 0.0
  %333 = vmatpush1.msra.mxu0 0.0
  %334 = vmatprep.subr.mxu0 0.0
  %335 = vmatpush1.msra.mxu0 0.0
  %336 = vmatprep.subr.mxu0 0.0
  %337 = vmatpush1.msra.mxu0 0.0
  %338 = vmatprep.subr.mxu0 0.0
  %339 = vmatpush1.msra.mxu0 0.0
  %340 = vmatprep.subr.mxu0 0.0
  %341 = vmatpush1.msra.mxu0 0.0
  %342 = vmatprep.subr.mxu0 0.0
  %343 = vmatpush1.msra.mxu0 0.0
  %344 = vmatprep.subr.mxu0 0.0
  %345 = vmatpush1.msra.mxu0 0.0
  %346 = vmatprep.subr.mxu0 0.0
  %347 = vmatpush1.msra.mxu0 0.0
  %348 = vmatprep.mubr.f32.mxu0 0.0
  %349 = vmatmul.mubr.f32.gmra.mrb[0].mxu0 %v29
  %v350 = vpop.f32.mrb[0].mxu0
  %v351 = vadd.f32 0.0, %v350
  %v352 = vpop.f32.mrb[0].mxu0
  %353 = vmatprep.mubr.f32.mxu0 0.0
  %354 = vmatmul.mubr.f32.gmra.mrb[0].mxu0 %v32
  %v355 = vpop.f32.mrb[0].mxu0
  %v356 = vadd.f32 0.0, %v355
  %v357 = vpop.f32.mrb[0].mxu0
  %358 = vdwg.mxu0
  %v359 = vmax.f32 %v351, 0.0
  %v360 = vmax.f32 %v356, 0.0
  %vm361 = vcmask 64512
  %362 = vst.msk [vmem:[%s4] sm:$0xff] %vm361, %v359
  %363 = vst.msk [vmem:[%s4 + $0x8] sm:$0xff] %vm361, %v360
  // Predicated region
  $region18: #{gcn_forward.1} parent=0 // pred_check
    _
  $region19: #{gcn_forward.1} parent=0 // pred_check_branch
    %365 = sbr.rel (0) target = $region21
  $region20: #{gcn_forward.1} parent=0 // pred_region
    _
  $region21: #{gcn_forward.1} parent=0 // pred_fallthru
    _
  // Predicated region
  $region22: #{gcn_forward.1} parent=0 // pred_check
    _
  $region23: #{gcn_forward.1} parent=0 // pred_check_branch
    %367 = sbr.rel (0) target = $region25
  $region24: #{gcn_forward.1} parent=0 // pred_region
    _
  $region25: #{gcn_forward.1} parent=0 // pred_fallthru
    _

</llo_original>
